<compile_context>
chip_gen: v7x
topology: tpu7x:2x2x1
jax: 0.10.0
libtpu: 0.0.40
codegen_flags: <defaults>
</compile_context>

<pallas_src>
import functools
import math

import jax
import jax.numpy as jnp
from jax.experimental import pallas as pl
from jax.experimental.pallas import tpu as pltpu


def _round_up(x, m):
    return (x + m - 1) // m * m


# ----------------------------------------------------------------------------
# Fused router kernel:  softmax(relu(x @ W1 + b1) @ W2 + b2)  over experts axis,
# stored transposed as [E_pad, TB].
# ----------------------------------------------------------------------------
def _router_kernel(x_ref, w1_ref, b1_ref, w2_ref, b2_ref, o_ref):
    # x arrives f32; cast to bf16 right before the MXU (cheap VPU work hidden
    # under the matmul) -- avoids a separate wrapper-side cast pass over x.
    x = x_ref[...].astype(jnp.bfloat16)

    # defined_model stand-in: Linear + ReLU (bf16 operands, f32 accumulate).
    h = jnp.dot(x, w1_ref[...], preferred_element_type=jnp.float32)
    h = jnp.maximum(h + b1_ref[...], 0.0)

    # router.h_layer: Linear(h_dim -> E_pad).  Padded expert lanes carry a
    # -1e30 bias (and zero weight columns) so they vanish in the softmax.
    logits = jnp.dot(h.astype(jnp.bfloat16), w2_ref[...],
                     preferred_element_type=jnp.float32)
    logits = logits + b2_ref[...]

    # softmax over the lane-dense padded experts axis.
    m = jnp.max(logits, axis=-1, keepdims=True)
    e = jnp.exp(logits - m)
    denom = jnp.sum(e, axis=-1, keepdims=True)
    # approx=True rides the EUP slot (~2^-12 rel. error); switch to approx=False
    # if exact parity of near-tie top-k selections with the f32 reference matters.
    p = e * pl.reciprocal(denom, approx=True)

    # In-kernel [TB, E_pad] -> [E_pad, TB] transpose (XLU slot, idle here) so the
    # downstream top_k over the batch axis needs no HBM relayout.
    o_ref[...] = p.T.astype(o_ref.dtype)


# ----------------------------------------------------------------------------
# Generation-aware VMEM budgeting / batch tiling
# ----------------------------------------------------------------------------
def _vmem_limit_bytes():
    try:
        cap = int(getattr(pltpu.get_tpu_info(), "vmem_capacity_bytes", 0))
    except Exception:
        cap = 0
    if cap <= 0:
        cap = 64 * 1024 * 1024  # conservative (v7x-sized) default
    # ~96 MiB on 128 MiB v5e/v6e, ~48 MiB on 64 MiB v7x.
    return min((cap * 3) // 4, 100 * 1024 * 1024)


def _choose_batch_tile(B, input_dim, h_dim, E_pad, vmem_budget, tb_max=512):
    """Pick the batch tile TB and padded batch Bp.

    Budget: double-buffered f32 x tile, single-buffered bf16 weights, f32+bf16
    hidden intermediate, f32 logits/exp intermediates, double-buffered f32
    transposed output tile.
    """
    per_row = (input_dim * 4 * 2          # x tile, f32, double-buffered
               + h_dim * (4 + 2)          # h (f32) + bf16 copy for 2nd matmul
               + E_pad * 4 * 2            # transposed output tile, double-buffered
               + E_pad * 4 * 2)           # logits / exp intermediates
    fixed = (input_dim * h_dim * 2 + h_dim * E_pad * 2   # bf16 weights (1 buffer)
             + (h_dim + E_pad) * 4)                       # f32 biases
    # TODO(synk): very large routers (input_dim*h_dim bf16 alone exceeding the
    # budget, e.g. 4Kx4K+ on 64 MiB v7x) need a K/N reduction-tiled fallback grid
    # ('arbitrary' axis + f32 accumulator scratch) instead of fully resident weights.
    avail = vmem_budget - fixed
    tb_fit = avail // per_row if avail > 0 else 16
    tb_fit = int(max(16, min(tb_fit, tb_max)))

    if B < 256:
        # Small batch: one grid step covering the 16-aligned batch.  (The
        # transposed [E_pad, TB] store requires TB % 128 == 0 or TB == Bp.)
        TB = _round_up(B, 16)
        Bp = TB
    else:
        # Multiple of 128 keeps the transposed store lane-dense and (8,128)-legal;
        # cap so there are >= 2 grid steps (both v7x TensorCores stay busy).
        TB = max(128, (tb_fit // 128) * 128)
        TB = min(TB, _round_up((B + 1) // 2, 128))
        Bp = _round_up(B, TB)
    return TB, Bp


# ----------------------------------------------------------------------------
# Router wrapper
# ----------------------------------------------------------------------------
def prepare_router_params(w1, b1, w2, b2):
    """One-time pad/cast of router weights (cache across forward calls).

    w1: [input_dim, h_dim], b1: [1, h_dim], w2: [h_dim, E], b2: [1, E]  (f32,
    pre-transposed).  Experts axis is padded to a multiple of 128 with zero
    weight columns and a -1e30 pad bias so padded lanes vanish in the softmax.
    """
    h_dim, E = w2.shape
    E_pad = _round_up(max(E, 128), 128)
    w2p = jnp.zeros((h_dim, E_pad), jnp.float32).at[:, :E].set(w2).astype(jnp.bfloat16)
    b2p = jnp.full((1, E_pad), -1e30, jnp.float32).at[0, :E].set(b2.reshape(-1))
    return (w1.astype(jnp.bfloat16),
            b1.reshape(1, -1).astype(jnp.float32),
            w2p, b2p)


def router_forward(x, router_params, *, num_experts, tb_max=512):
    """softmax(relu(x @ w1 + b1) @ w2 + b2, experts axis) -> probs of shape [E, B]."""
    w1_bf, b1, w2_bf, b2 = router_params
    B, input_dim = x.shape
    h_dim = w1_bf.shape[1]
    E_pad = w2_bf.shape[1]

    vmem_budget = _vmem_limit_bytes()
    TB, Bp = _choose_batch_tile(B, input_dim, h_dim, E_pad, vmem_budget, tb_max)
    if Bp != B:
        x = jnp.pad(x, ((0, Bp - B), (0, 0)))
    grid = (Bp // TB,)

    const = lambda i: (0, 0)
    flops = 2 * Bp * (input_dim * h_dim + h_dim * E_pad)
    transcendentals = Bp * E_pad
    bytes_accessed = (Bp * input_dim * 4                       # f32 x
                      + input_dim * h_dim * 2 + h_dim * E_pad * 2
                      + h_dim * 4 + E_pad * 4
                      + Bp * E_pad * 4)                        # f32 probs

    out = pl.pallas_call(
        _router_kernel,
        out_shape=jax.ShapeDtypeStruct((E_pad, Bp), jnp.float32),
        grid_spec=pltpu.PrefetchScalarGridSpec(
            num_scalar_prefetch=0,
            grid=grid,
            in_specs=[
                # pipelined (double-buffered) f32 x tile
                pl.BlockSpec((TB, input_dim), lambda i: (i, 0)),
                # VMEM-resident weights/biases: constant index_map -> single buffer
                pl.BlockSpec((input_dim, h_dim), const, pipeline_mode=pl.Buffered(1)),
                pl.BlockSpec((1, h_dim), const, pipeline_mode=pl.Buffered(1)),
                pl.BlockSpec((h_dim, E_pad), const, pipeline_mode=pl.Buffered(1)),
                pl.BlockSpec((1, E_pad), const, pipeline_mode=pl.Buffered(1)),
            ],
            # transposed output: [E_pad, TB] block per batch tile
            out_specs=pl.BlockSpec((E_pad, TB), lambda i: (0, i)),
        ),
        compiler_params=pltpu.CompilerParams(
            dimension_semantics=("parallel",),   # batch tiles shard across v7x TCs
            vmem_limit_bytes=vmem_budget,
        ),
        cost_estimate=pl.CostEstimate(
            flops=flops,
            transcendentals=transcendentals,
            bytes_accessed=bytes_accessed,
        ),
    )(x, w1_bf, b1, w2_bf, b2)

    # Slice off padded expert lanes and padded batch rows.
    return out[:num_experts, :B]     # [E, B]


# ----------------------------------------------------------------------------
# MoEWrapperExpertSelection.forward
# ----------------------------------------------------------------------------
@functools.partial(jax.jit, static_argnames=("K",))
def moe_forward_expert_selection(x, router_params, expert_w, expert_b, *, K):
    """Forward pass of MoEWrapperExpertSelection.

    TODO(synk): `defined_model` and the experts are arbitrary nn.Modules in the
    original code; a single Linear(+ReLU) stands in for each here, and the
    data-dependent top-k gather/scatter-add dispatch stays in plain JAX.
    """
    num_experts = expert_w.shape[0]
    if num_experts == 1:
        return x @ expert_w[0] + expert_b[0], None

    B = x.shape[0]
    probs_eb = router_forward(x, router_params, num_experts=num_experts)   # [E, B]

    # torch.topk(probs, batch_K, dim=0): top batch rows per expert column.
    batch_K = min(math.ceil(K * 1.0 / num_experts * B), B)   # guard: batch_K <= B
    ws, ib = jax.lax.top_k(probs_eb, batch_K)                 # [E, batch_K]
    nws = jax.nn.softmax(ws, axis=1)                          # renorm_sm = Softmax(dim=0)

    # Stacked-weight batched expert matmul + single scatter-add (replaces the
    # serialized per-expert gather/matmul/scatter loop).
    sel = x[ib]                                               # [E, batch_K, input_dim]
    sel_out = jnp.einsum("ebi,eio->ebo", sel, expert_w,
                         preferred_element_type=jnp.float32)
    sel_out = (sel_out + expert_b[:, None, :]) * nws[..., None]
    out_dim = expert_w.shape[-1]
    output = jnp.zeros((B, out_dim), jnp.float32)
    output = output.at[ib.reshape(-1)].add(sel_out.reshape(-1, out_dim))
    return output, probs_eb


# ----------------------------------------------------------------------------
# Helpers / references
# ----------------------------------------------------------------------------
def _init_linear(key, fan_in, fan_out):
    """PyTorch-style init U(-1/sqrt(fan_in), 1/sqrt(fan_in)); weight pre-transposed."""
    kw, kb = jax.random.split(key)
    bound = 1.0 / (fan_in ** 0.5)
    w = jax.random.uniform(kw, (fan_in, fan_out), jnp.float32, -bound, bound)
    b = jax.random.uniform(kb, (1, fan_out), jnp.float32, -bound, bound)
    return w, b


def _router_reference(x, w1, b1, w2, b2):
    h = jnp.maximum(x @ w1 + b1, 0.0)
    return jax.nn.softmax(h @ w2 + b2, axis=1)


def _dispatch_reference(x, probs_eb, expert_w, expert_b, K):
    """PyTorch-style per-expert loop dispatch, using the SAME router probs."""
    B = x.shape[0]
    E = expert_w.shape[0]
    batch_K = min(math.ceil(K * 1.0 / E * B), B)
    ws, ib = jax.lax.top_k(probs_eb, batch_K)      # [E, batch_K]
    nws = jax.nn.softmax(ws, axis=1)
    out = jnp.zeros((B, expert_w.shape[-1]), jnp.float32)
    for e in range(E):
        idx = ib[e]
        sel_out = x[idx] @ expert_w[e] + expert_b[e]
        out = out.at[idx].add(sel_out * nws[e][:, None])
    return out


if __name__ == "__main__":
    batch = 8
    input_dim = 32        # model input features
    h_output_dim = 16     # defined_model.h_output_dim
    num_experts = 4
    K = 2
    output_dim = 24       # expert output features

    key = jax.random.PRNGKey(0)
    keys = jax.random.split(key, 3 + num_experts)

    x = jax.random.normal(keys[0], (batch, input_dim), jnp.float32)
    # defined_model stand-in: Linear(input_dim -> h_output_dim) + ReLU.
    w1, b1 = _init_linear(keys[1], input_dim, h_output_dim)
    # router.h_layer: Linear(h_output_dim -> num_experts)
    w2, b2 = _init_linear(keys[2], h_output_dim, num_experts)
    # experts: Linear(input_dim -> output_dim) stand-ins, stacked for the batched dispatch.
    experts = [_init_linear(keys[3 + e], input_dim, output_dim) for e in range(num_experts)]
    expert_w = jnp.stack([w for w, _ in experts])                 # [E, input_dim, output_dim]
    expert_b = jnp.stack([b.reshape(-1) for _, b in experts])     # [E, output_dim]

    # One-time weight padding/casting (cached across forward calls).
    router_params = prepare_router_params(w1, b1, w2, b2)

    out, probs_eb = moe_forward_expert_selection(x, router_params, expert_w, expert_b, K=K)
    out = jax.block_until_ready(out)
    probs_eb = jax.block_until_ready(probs_eb)

    # 1) Router kernel vs pure-JAX f32 reference (bf16 MXU operands + approx EUP
    #    reciprocal in the kernel -> loose tolerance expected).
    ref_probs = _router_reference(x, w1, b1, w2, b2)              # [B, E]
    assert probs_eb.shape == (num_experts, batch)
    assert jnp.allclose(probs_eb.T, ref_probs, atol=3e-2, rtol=3e-2)
    assert jnp.allclose(jnp.sum(probs_eb, axis=0), jnp.ones((batch,)), atol=5e-3)

    # 2) Stacked-einsum dispatch vs the per-expert-loop reference, driven by the
    #    SAME Pallas router probabilities (isolates the dispatch refactor).
    ref_out = _dispatch_reference(x, probs_eb, expert_w, expert_b, K)
    assert out.shape == (batch, output_dim)
    assert bool(jnp.all(jnp.isfinite(out)))
    assert jnp.allclose(out, ref_out, atol=1e-4, rtol=1e-4)

    print("KERNEL_OK")
</pallas_src>

<mosaic_0001>
module attributes {stable_mosaic.version = 11 : i64} {
  func.func @_router_kernel(%arg0: i32, %arg1: memref<16x32xf32, #tpu.memory_space<vmem>>, %arg2: memref<32x16xbf16, #tpu.memory_space<vmem>>, %arg3: memref<1x16xf32, #tpu.memory_space<vmem>>, %arg4: memref<16x128xbf16, #tpu.memory_space<vmem>>, %arg5: memref<1x128xf32, #tpu.memory_space<vmem>>, %arg6: memref<128x16xf32, #tpu.memory_space<vmem>>) attributes {dimension_semantics = [#tpu.dimension_semantics<parallel>], iteration_bounds = array<i64: 1>, scalar_prefetch = 0 : i64, scratch_operands = 0 : i64, tpu.core_type = #tpu.core_type<tc>, window_params = [{transform_indices = @transform_0, window_bounds = array<i64: 16, 32>}, {pipeline_mode = #tpu.pipeline_mode<synchronous>, transform_indices = @transform_1, window_bounds = array<i64: 32, 16>}, {pipeline_mode = #tpu.pipeline_mode<synchronous>, transform_indices = @transform_2, window_bounds = array<i64: 1, 16>}, {pipeline_mode = #tpu.pipeline_mode<synchronous>, transform_indices = @transform_3, window_bounds = array<i64: 16, 128>}, {pipeline_mode = #tpu.pipeline_mode<synchronous>, transform_indices = @transform_4, window_bounds = array<i64: 1, 128>}, {transform_indices = @transform_5, window_bounds = array<i64: 128, 16>}]} {
    %c0 = arith.constant 0 : index
    %c0_0 = arith.constant 0 : index
    %0 = vector.load %arg1[%c0, %c0_0] : memref<16x32xf32, #tpu.memory_space<vmem>>, vector<16x32xf32>
    %1 = arith.truncf %0 : vector<16x32xf32> to vector<16x32xbf16>
    %c0_1 = arith.constant 0 : index
    %c0_2 = arith.constant 0 : index
    %2 = vector.load %arg2[%c0_1, %c0_2] : memref<32x16xbf16, #tpu.memory_space<vmem>>, vector<32x16xbf16>
    %cst = arith.constant dense<0.000000e+00> : vector<16x16xf32>
    %3 = tpu.matmul %1, %2, %cst {dimension_numbers = #tpu.dot_dimension_numbers<[1], [0], [0], [1], [0, 0, 1, 1], [], []>} : vector<16x32xbf16>, vector<32x16xbf16>, vector<16x16xf32> -> vector<16x16xf32>
    %c0_3 = arith.constant 0 : index
    %c0_4 = arith.constant 0 : index
    %4 = vector.load %arg3[%c0_3, %c0_4] : memref<1x16xf32, #tpu.memory_space<vmem>>, vector<1x16xf32>
    %5 = vector.broadcast %4 : vector<1x16xf32> to vector<16x16xf32>
    %6 = arith.addf %3, %5 : vector<16x16xf32>
    %cst_5 = arith.constant 0.000000e+00 : f32
    %7 = vector.broadcast %cst_5 : f32 to vector<16x16xf32>
    %8 = arith.maximumf %6, %7 : vector<16x16xf32>
    %9 = arith.truncf %8 : vector<16x16xf32> to vector<16x16xbf16>
    %c0_6 = arith.constant 0 : index
    %c0_7 = arith.constant 0 : index
    %10 = vector.load %arg4[%c0_6, %c0_7] : memref<16x128xbf16, #tpu.memory_space<vmem>>, vector<16x128xbf16>
    %cst_8 = arith.constant dense<0.000000e+00> : vector<16x128xf32>
    %11 = tpu.matmul %9, %10, %cst_8 {dimension_numbers = #tpu.dot_dimension_numbers<[1], [0], [0], [1], [0, 0, 1, 1], [], []>} : vector<16x16xbf16>, vector<16x128xbf16>, vector<16x128xf32> -> vector<16x128xf32>
    %c0_9 = arith.constant 0 : index
    %c0_10 = arith.constant 0 : index
    %12 = vector.load %arg5[%c0_9, %c0_10] : memref<1x128xf32, #tpu.memory_space<vmem>>, vector<1x128xf32>
    %13 = vector.broadcast %12 : vector<1x128xf32> to vector<16x128xf32>
    %14 = arith.addf %11, %13 : vector<16x128xf32>
    %cst_11 = arith.constant dense<0xFF800000> : vector<16xf32>
    %15 = vector.multi_reduction <maximumf>, %14, %cst_11 [1] : vector<16x128xf32> to vector<16xf32>
    %16 = vector.shape_cast %15 : vector<16xf32> to vector<16x1xf32>
    %17 = vector.broadcast %16 : vector<16x1xf32> to vector<16x128xf32>
    %18 = arith.subf %14, %17 : vector<16x128xf32>
    %19 = math.exp %18 : vector<16x128xf32>
    %cst_12 = arith.constant dense<0.000000e+00> : vector<16xf32>
    %20 = vector.multi_reduction <add>, %19, %cst_12 [1] : vector<16x128xf32> to vector<16xf32>
    %21 = vector.shape_cast %20 : vector<16xf32> to vector<16x1xf32>
    %22 = tpu.reciprocal %21 {approx = true} : vector<16x1xf32> -> vector<16x1xf32>
    %23 = vector.broadcast %22 : vector<16x1xf32> to vector<16x128xf32>
    %24 = arith.mulf %19, %23 : vector<16x128xf32>
    %25 = tpu.transpose %24, [1, 0] : vector<16x128xf32> -> vector<128x16xf32>
    %c0_13 = arith.constant 0 : index
    %c0_14 = arith.constant 0 : index
    %26 = vector.load %arg6[%c0_13, %c0_14] : memref<128x16xf32, #tpu.memory_space<vmem>>, vector<128x16xf32>
    tpu.vector_store %arg6[%c0_13, %c0_14], %25 {strides = array<i32>} : memref<128x16xf32, #tpu.memory_space<vmem>>, vector<128x16xf32>,
    return
  }
  func.func @transform_0(%arg0: i32) -> (i32, i32) {
    %c0_i32 = arith.constant 0 : i32
    %c0_i32_0 = arith.constant 0 : i32
    return %arg0, %c0_i32 : i32, i32
  }
  func.func @transform_1(%arg0: i32) -> (i32, i32) {
    %c0_i32 = arith.constant 0 : i32
    %c0_i32_0 = arith.constant 0 : i32
    %c0_i32_1 = arith.constant 0 : i32
    return %c0_i32, %c0_i32_0 : i32, i32
  }
  func.func @transform_2(%arg0: i32) -> (i32, i32) {
    %c0_i32 = arith.constant 0 : i32
    %c0_i32_0 = arith.constant 0 : i32
    %c0_i32_1 = arith.constant 0 : i32
    return %c0_i32, %c0_i32_0 : i32, i32
  }
  func.func @transform_3(%arg0: i32) -> (i32, i32) {
    %c0_i32 = arith.constant 0 : i32
    %c0_i32_0 = arith.constant 0 : i32
    %c0_i32_1 = arith.constant 0 : i32
    return %c0_i32, %c0_i32_0 : i32, i32
  }
  func.func @transform_4(%arg0: i32) -> (i32, i32) {
    %c0_i32 = arith.constant 0 : i32
    %c0_i32_0 = arith.constant 0 : i32
    %c0_i32_1 = arith.constant 0 : i32
    return %c0_i32, %c0_i32_0 : i32, i32
  }
  func.func @transform_5(%arg0: i32) -> (i32, i32) {
    %c0_i32 = arith.constant 0 : i32
    %c0_i32_0 = arith.constant 0 : i32
    return %c0_i32, %arg0 : i32, i32
  }
}

</mosaic_0001>

<llo_original>
// kernel: moe_forward_expert_selection.1
$region0: #{moe_forward_expert_selection.1}
  #allocation0 [shape = 'u32[]', space=smem, size = 0x4, offset = 0x4, fixed_abs, tag = 'smem constant byte address 0x4 - core index']
  #allocation1 [shape = 'u32[144,128]{1,0:T(1,128)}', space=vmem, size = 0x12000, scoped, tag = 'internal scratch']
  %s0 = inlined_call_operand.vmem [shape: f32[16,32], index: 0, kind: input, shape index: {}]
  %s1 = inlined_call_operand.vmem [shape: bf16[32,16], index: 1, kind: input, shape index: {}]
  %s2 = inlined_call_operand.vmem [shape: f32[1,16], index: 2, kind: input, shape index: {}]
  %s3 = inlined_call_operand.vmem [shape: bf16[16,128], index: 3, kind: input, shape index: {}]
  %s4 = inlined_call_operand.vmem [shape: f32[1,128], index: 4, kind: input, shape index: {}]
  %s5 = inlined_call_operand.vmem [shape: f32[128,16], index: 5, kind: output, shape index: {}]
  %s6 = sld [smem:[#allocation0]]
  $region30: #{moe_forward_expert_selection.1} parent=0
    _
  %s8 = ssub.s32 1, %s6
  %s9 = scalar_select 0, %s8, %s6
  // Predicated region
  $region2: #{moe_forward_expert_selection.1} parent=0 // pred_check
    _
  $region3: #{moe_forward_expert_selection.1} parent=0 // pred_check_branch
    %11 = sbr.rel (0) target = $region5
  $region4: #{moe_forward_expert_selection.1} parent=0 // pred_region
    _
  $region5: #{moe_forward_expert_selection.1} parent=0 // pred_fallthru
    _
  // Predicated region
  $region6: #{moe_forward_expert_selection.1} parent=0 // pred_check
    _
  $region7: #{moe_forward_expert_selection.1} parent=0 // pred_check_branch
    %13 = sbr.rel (0) target = $region9
  $region8: #{moe_forward_expert_selection.1} parent=0 // pred_region
    _
  $region9: #{moe_forward_expert_selection.1} parent=0 // pred_fallthru
    _
  // Predicated region
  $region10: #{moe_forward_expert_selection.1} parent=0 // pred_check
    _
  $region11: #{moe_forward_expert_selection.1} parent=0 // pred_check_branch
    %15 = sbr.rel (0) target = $region13
  $region12: #{moe_forward_expert_selection.1} parent=0 // pred_region
    _
  $region13: #{moe_forward_expert_selection.1} parent=0 // pred_fallthru
    _
  // Predicated region
  $region14: #{moe_forward_expert_selection.1} parent=0 // pred_check
    _
  $region15: #{moe_forward_expert_selection.1} parent=0 // pred_check_branch
    %17 = sbr.rel (0) target = $region17
  $region16: #{moe_forward_expert_selection.1} parent=0 // pred_region
    _
  $region17: #{moe_forward_expert_selection.1} parent=0 // pred_fallthru
    _
  // Predicated region
  $region18: #{moe_forward_expert_selection.1} parent=0 // pred_check
    _
  $region19: #{moe_forward_expert_selection.1} parent=0 // pred_check_branch
    %19 = sbr.rel (0) target = $region21
  $region20: #{moe_forward_expert_selection.1} parent=0 // pred_region
    _
  $region21: #{moe_forward_expert_selection.1} parent=0 // pred_fallthru
    _
  %v21 = vld [vmem:[%s0] sm:$0xff]
  %v22 = vld [vmem:[%s0 + $0x8] sm:$0xff]
  %v23 = vpack.c.bf16 %v22, %v21
  %v24 = vld [vmem:[%s1] sm:$0xf]
  %v25 = vld [vmem:[%s1 + $0x4] sm:$0xf]
  %v26 = vld [vmem:[%s1 + $0x8] sm:$0xf]
  %v27 = vld [vmem:[%s1 + $0xc] sm:$0xf]
  %v28 = vld [vmem:[%s2] sm:$0x1]
  %v30 = vlaneseq
  %v31 = vshrl.u32 %v30, 7
  %v32 = vsub.s32 0, %v31
  %v33 = vrot.slane %v28, %v32
  %v39 = vunpack.c.l.b16 %v24
  %v40 = vunpack.c.l.b16 %v25
  %v41 = vunpack.c.l.b16 %v26
  %v42 = vunpack.c.l.b16 %v27
  %v43 = vpack.c.b16 %v40, %v39
  %v44 = vpack.c.b16 %v42, %v41
  %vm47 = vcmask 261120
  %v49 = vsel %vm47, %v23, 0
  %51 = vmatprep.subr.bf16.mxu0 0
  %52 = vmatpush1.bf16.msra.mxu0 %v43
  %53 = vmatprep.subr.bf16.mxu0 0
  %54 = vmatpush1.bf16.msra.mxu0 %v44
  %55 = vmatprep.subr.bf16.mxu0 0
  %56 = vmatpush1.bf16.msra.mxu0 0
  %57 = vmatprep.subr.bf16.mxu0 0
  %58 = vmatpush1.bf16.msra.mxu0 0
  %59 = vmatprep.subr.bf16.mxu0 0
  %60 = vmatpush1.bf16.msra.mxu0 0
  %61 = vmatprep.subr.bf16.mxu0 0
  %62 = vmatpush1.bf16.msra.mxu0 0
  %63 = vmatprep.subr.bf16.mxu0 0
  %64 = vmatpush1.bf16.msra.mxu0 0
  %65 = vmatprep.subr.bf16.mxu0 0
  %66 = vmatpush1.bf16.msra.mxu0 0
  %67 = vmatprep.subr.bf16.mxu0 0
  %68 = vmatpush1.bf16.msra.mxu0 0
  %69 = vmatprep.subr.bf16.mxu0 0
  %70 = vmatpush1.bf16.msra.mxu0 0
  %71 = vmatprep.subr.bf16.mxu0 0
  %72 = vmatpush1.bf16.msra.mxu0 0
  %73 = vmatprep.subr.bf16.mxu0 0
  %74 = vmatpush1.bf16.msra.mxu0 0
  %75 = vmatprep.subr.bf16.mxu0 0
  %76 = vmatpush1.bf16.msra.mxu0 0
  %77 = vmatprep.subr.bf16.mxu0 0
  %78 = vmatpush1.bf16.msra.mxu0 0
  %79 = vmatprep.subr.bf16.mxu0 0
  %80 = vmatpush1.bf16.msra.mxu0 0
  %81 = vmatprep.subr.bf16.mxu0 0
  %82 = vmatpush1.bf16.msra.mxu0 0
  %83 = vmatprep.mubr.bf16.mxu0 0
  %84 = vmatmul.mubr.bf16.gmra.mrb[0].mxu0 %v49
  %v85 = vpop.f32.mrb[0].mxu0
  %v86 = vadd.f32 %v33, %v85
  %v87 = vpop.f32.mrb[0].mxu0
  %v88 = vpop.f32.mrb[0].mxu0
  %v89 = vadd.f32 %v33, %v88
  %v90 = vpop.f32.mrb[0].mxu0
  %91 = vdwg.mxu0
  %v92 = vmax.f32 %v86, 0.0
  %v93 = vmax.f32 %v89, 0.0
  %v94 = vpack.c.bf16 %v93, %v92
  %v95 = vld [vmem:[%s3] sm:$0xf]
  %v96 = vld [vmem:[%s3 + $0x4] sm:$0xf]
  %v97 = vld [vmem:[%s4] sm:$0x1]
  %v99 = vlaneseq
  %v100 = vshrl.u32 %v99, 7
  %v101 = vsub.s32 0, %v100
  %v102 = vrot.slane %v97, %v101
  %v106 = vunpack.c.l.b16 %v95
  %v107 = vunpack.c.l.b16 %v96
  %v108 = vpack.c.b16 %v107, %v106
  %vm110 = vcmask 130048
  %v112 = vsel %vm110, %v94, 0
  %114 = vmatprep.subr.bf16.mxu0 0
  %115 = vmatpush1.bf16.msra.mxu0 %v108
  %116 = vmatprep.subr.bf16.mxu0 0
  %117 = vmatpush1.bf16.msra.mxu0 0
  %118 = vmatprep.subr.bf16.mxu0 0
  %119 = vmatpush1.bf16.msra.mxu0 0
  %120 = vmatprep.subr.bf16.mxu0 0
  %121 = vmatpush1.bf16.msra.mxu0 0
  %122 = vmatprep.subr.bf16.mxu0 0
  %123 = vmatpush1.bf16.msra.mxu0 0
  %124 = vmatprep.subr.bf16.mxu0 0
  %125 = vmatpush1.bf16.msra.mxu0 0
  %126 = vmatprep.subr.bf16.mxu0 0
  %127 = vmatpush1.bf16.msra.mxu0 0
  %128 = vmatprep.subr.bf16.mxu0 0
  %129 = vmatpush1.bf16.msra.mxu0 0
  %130 = vmatprep.subr.bf16.mxu0 0
  %131 = vmatpush1.bf16.msra.mxu0 0
  %132 = vmatprep.subr.bf16.mxu0 0
  %133 = vmatpush1.bf16.msra.mxu0 0
  %134 = vmatprep.subr.bf16.mxu0 0
  %135 = vmatpush1.bf16.msra.mxu0 0
  %136 = vmatprep.subr.bf16.mxu0 0
  %137 = vmatpush1.bf16.msra.mxu0 0
  %138 = vmatprep.subr.bf16.mxu0 0
  %139 = vmatpush1.bf16.msra.mxu0 0
  %140 = vmatprep.subr.bf16.mxu0 0
  %141 = vmatpush1.bf16.msra.mxu0 0
  %142 = vmatprep.subr.bf16.mxu0 0
  %143 = vmatpush1.bf16.msra.mxu0 0
  %144 = vmatprep.subr.bf16.mxu0 0
  %145 = vmatpush1.bf16.msra.mxu0 0
  %146 = vmatprep.mubr.bf16.mxu0 0
  %147 = vmatmul.mubr.bf16.gmra.mrb[0].mxu0 %v112
  %v148 = vpop.f32.mrb[0].mxu0
  %v149 = vadd.f32 %v102, %v148
  %v150 = vpop.f32.mrb[0].mxu0
  %v151 = vpop.f32.mrb[0].mxu0
  %v152 = vadd.f32 %v102, %v151
  %v153 = vpop.f32.mrb[0].mxu0
  %154 = vdwg.mxu0
  %155 = vmax.xlane.f32.xlu0 %v149
  %v156 = vpop.xlane.xlu0 %155
  %157 = vmax.xlane.f32.xlu0 %v152
  %v158 = vpop.xlane.xlu0 %157
  %v159 = vsub.f32 %v149, %v156
  %v160 = vsub.f32 %v152, %v158
  %v161 = vmul.f32 %v159, 1.442695
  %v162 = vpow.pop %v161
  %v163 = vmul.f32 %v160, 1.442695
  %v164 = vpow.pop %v163
  %165 = vadd.xlane.f32.xlu0 %v162
  %v166 = vpop.xlane.xlu0 %165
  %167 = vadd.xlane.f32.xlu0 %v164
  %v168 = vpop.xlane.xlu0 %167
  %v169 = vrcp.pop %v166
  %v170 = vrcp.pop %v168
  %v171 = vmul.f32 %v162, %v169
  %v172 = vmul.f32 %v164, %v170
  %173 = vxpose.xlu0.b32.start [1/16] %v171, 128
  %174 = vxpose.xlu0.b32.cont [2/16] %v172, 128
  %175 = vxpose.xlu0.b32.cont [3/16] 0.0, 128
  %176 = vxpose.xlu0.b32.cont [4/16] 0.0, 128
  %177 = vxpose.xlu0.b32.cont [5/16] 0.0, 128
  %178 = vxpose.xlu0.b32.cont [6/16] 0.0, 128
  %179 = vxpose.xlu0.b32.cont [7/16] 0.0, 128
  %180 = vxpose.xlu0.b32.cont [8/16] 0.0, 128
  %181 = vxpose.xlu0.b32.cont [9/16] 0.0, 128
  %182 = vxpose.xlu0.b32.cont [10/16] 0.0, 128
  %183 = vxpose.xlu0.b32.cont [11/16] 0.0, 128
  %184 = vxpose.xlu0.b32.cont [12/16] 0.0, 128
  %185 = vxpose.xlu0.b32.cont [13/16] 0.0, 128
  %186 = vxpose.xlu0.b32.cont [14/16] 0.0, 128
  %187 = vxpose.xlu0.b32.cont [15/16] 0.0, 128
  %188 = vxpose.xlu0.b32.end [16/16] 0.0, 128
  %v189 = vpop.trf.xlu0
  %v190 = vpop.trf.xlu0
  %v191 = vpop.trf.xlu0
  %v192 = vpop.trf.xlu0
  %v193 = vpop.trf.xlu0
  %v194 = vpop.trf.xlu0
  %v195 = vpop.trf.xlu0
  %v196 = vpop.trf.xlu0
  %v197 = vpop.trf.xlu0
  %v198 = vpop.trf.xlu0
  %v199 = vpop.trf.xlu0
  %v200 = vpop.trf.xlu0
  %v201 = vpop.trf.xlu0
  %v202 = vpop.trf.xlu0
  %v203 = vpop.trf.xlu0
  %v204 = vpop.trf.xlu0
  %205 = vst.msk [vmem:[%s5] sm:$0xff] %vm110, %v189
  %206 = vst.msk [vmem:[%s5 + $0x8] sm:$0xff] %vm110, %v190
  %207 = vst.msk [vmem:[%s5 + $0x10] sm:$0xff] %vm110, %v191
  %208 = vst.msk [vmem:[%s5 + $0x18] sm:$0xff] %vm110, %v192
  %209 = vst.msk [vmem:[%s5 + $0x20] sm:$0xff] %vm110, %v193
  %210 = vst.msk [vmem:[%s5 + $0x28] sm:$0xff] %vm110, %v194
  %211 = vst.msk [vmem:[%s5 + $0x30] sm:$0xff] %vm110, %v195
  %212 = vst.msk [vmem:[%s5 + $0x38] sm:$0xff] %vm110, %v196
  %213 = vst.msk [vmem:[%s5 + $0x40] sm:$0xff] %vm110, %v197
  %214 = vst.msk [vmem:[%s5 + $0x48] sm:$0xff] %vm110, %v198
  %215 = vst.msk [vmem:[%s5 + $0x50] sm:$0xff] %vm110, %v199
  %216 = vst.msk [vmem:[%s5 + $0x58] sm:$0xff] %vm110, %v200
  %217 = vst.msk [vmem:[%s5 + $0x60] sm:$0xff] %vm110, %v201
  %218 = vst.msk [vmem:[%s5 + $0x68] sm:$0xff] %vm110, %v202
  %219 = vst.msk [vmem:[%s5 + $0x70] sm:$0xff] %vm110, %v203
  %220 = vst.msk [vmem:[%s5 + $0x78] sm:$0xff] %vm110, %v204
  // Predicated region
  $region22: #{moe_forward_expert_selection.1} parent=0 // pred_check
    _
  $region23: #{moe_forward_expert_selection.1} parent=0 // pred_check_branch
    %222 = sbr.rel (0) target = $region25
  $region24: #{moe_forward_expert_selection.1} parent=0 // pred_region
    _
  $region25: #{moe_forward_expert_selection.1} parent=0 // pred_fallthru
    _
  // Predicated region
  $region26: #{moe_forward_expert_selection.1} parent=0 // pred_check
    _
  $region27: #{moe_forward_expert_selection.1} parent=0 // pred_check_branch
    %224 = sbr.rel (0) target = $region29
  $region28: #{moe_forward_expert_selection.1} parent=0 // pred_region
    _
  $region29: #{moe_forward_expert_selection.1} parent=0 // pred_fallthru
    _

</llo_original>
